<compile_context>
chip_gen: v5e
topology: v5e:2x2
jax: 0.10.0
libtpu: 0.0.40
codegen_flags: <defaults>
</compile_context>

<pallas_src>
import jax
import jax.numpy as jnp
from jax import lax
from jax.experimental import pallas as pl
from jax.experimental.pallas import tpu as pltpu

_SUBLANES = 8
_LANES = 128
_MIB = 1024 * 1024


def _round_up(x, m):
    return ((x + m - 1) // m) * m


def _chip_config():
    """Returns (vmem_capacity_bytes, num_tensorcores) with conservative fallbacks."""
    vmem_cap = 64 * _MIB  # conservative default (v7x-sized VMEM)
    try:
        info = pltpu.get_tpu_info()
        vmem_cap = int(getattr(info, "vmem_capacity_bytes", vmem_cap))
    except Exception:
        pass
    num_cores = 1
    try:
        kind = jax.devices()[0].device_kind.lower()
        if "v7" in kind or "7x" in kind:
            num_cores = 2  # v7x has 2 TensorCores per chip
    except Exception:
        pass
    return vmem_cap, max(1, num_cores)


def _make_kernel(chunk, n_chunks, unroll):
    """Kernel factory: accumulates zx*py + zy*px over row chunks of the tile."""

    def kernel(zx_ref, zy_ref, px_ref, py_ref, o_ref, acc_ref):
        s = pl.program_id(1)
        n_s = pl.num_programs(1)
        d = zx_ref.shape[1]

        @pl.when(s == 0)
        def _():
            acc_ref[...] = jnp.zeros_like(acc_ref)

        def accum(r0):
            # (chunk, D) f32 working set only -- never a full-tile f32 temp.
            zx = zx_ref[pl.ds(r0, chunk), :].astype(jnp.float32)
            zy = zy_ref[pl.ds(r0, chunk), :].astype(jnp.float32)
            px = px_ref[pl.ds(r0, chunk), :].astype(jnp.float32)
            py = py_ref[pl.ds(r0, chunk), :].astype(jnp.float32)
            t = zx * py + zy * px
            # Reduce over row groups (non-minor axis => pure vreg adds).
            acc_ref[...] += jnp.sum(t.reshape(chunk // _SUBLANES, _SUBLANES, d), axis=0)

        if n_chunks == 1:
            accum(0)
        else:
            lax.fori_loop(
                0,
                n_chunks,
                lambda ci, c: (accum(pl.multiple_of(ci * chunk, chunk)), c)[1],
                0,
                unroll=unroll,
            )

        # Single cross-lane/sublane reduction per core, only in the epilogue.
        @pl.when(s == n_s - 1)
        def _():
            o_ref[...] = jnp.full(o_ref.shape, jnp.sum(acc_ref[...]), dtype=jnp.float32)

    return kernel


def simsiam_loss(zx, zy, px, py):
    """Computes the SimSiam loss value (scalar, float32). Accepts f32 or bf16 inputs."""
    B, D = zx.shape
    assert zy.shape == (B, D) and px.shape == (B, D) and py.shape == (B, D)

    vmem_cap, detected_cores = _chip_config()

    def run(nc, core_parallel):
        itemsize = jnp.dtype(zx.dtype).itemsize
        sub_mult = max(_SUBLANES, 32 // itemsize)  # 8 for f32, 16 for bf16

        # Per-generation VMEM sizing: ~96 MiB scoped limit on 128 MiB chips,
        # ~48 MiB on 64 MiB chips (v7x).
        vmem_limit = min(int(0.75 * vmem_cap), vmem_cap - 16 * _MIB)
        vmem_limit = max(vmem_limit, 32 * _MIB)
        # 4 inputs x 2 pipeline buffers x (tb x D x itemsize) <= input_budget; keep
        # headroom for the f32 chunk intermediates, the (8, D) accumulator and
        # Mosaic-internal scratch.
        input_budget = min(vmem_limit - 12 * _MIB, 64 * _MIB)

        # Rows per grid step: bytes-capped (no fixed row cap), clamped to the
        # per-core row count so small batches don't over-pad.
        tb = input_budget // (4 * 2 * D * itemsize)
        tb = max(sub_mult, (tb // sub_mult) * sub_mult)
        per_core_rows = _round_up(-(-B // nc), sub_mult)
        tb = min(tb, per_core_rows)

        # In-kernel row chunking: cap the f32 working set (~512 KiB per operand)
        # so up-casts / products never approach the input tile size.
        chunk = (512 * 1024) // (D * 4)
        chunk = max(sub_mult, min((chunk // sub_mult) * sub_mult, tb))
        tb = max(chunk, (tb // chunk) * chunk)
        n_chunks = tb // chunk

        b_pad = _round_up(B, nc * tb)
        steps = b_pad // (nc * tb)

        zxp, zyp, pxp, pyp = zx, zy, px, py
        if b_pad != B:
            pad = ((0, b_pad - B), (0, 0))
            # Zero rows contribute exactly 0 to both dot products -> no masking.
            zxp = jnp.pad(zx, pad)
            zyp = jnp.pad(zy, pad)
            pxp = jnp.pad(px, pad)
            pyp = jnp.pad(py, pad)

        in_spec = pl.BlockSpec((tb, D), lambda c, s: (c * steps + s, 0))
        out_spec = pl.BlockSpec((_SUBLANES, _LANES), lambda c, s: (c, 0))

        if core_parallel:
            dim_sem = (pltpu.CORE_PARALLEL, pltpu.ARBITRARY)
        else:
            dim_sem = ("arbitrary", "arbitrary")

        cost = pl.CostEstimate(
            flops=4 * b_pad * D,
            transcendentals=0,
            bytes_accessed=4 * b_pad * D * itemsize + nc * _SUBLANES * _LANES * 4,
        )

        kernel = _make_kernel(chunk, n_chunks, unroll=(n_chunks <= 8))

        out = pl.pallas_call(
            kernel,
            out_shape=jax.ShapeDtypeStruct((nc * _SUBLANES, _LANES), jnp.float32),
            grid_spec=pltpu.PrefetchScalarGridSpec(
                num_scalar_prefetch=0,
                grid=(nc, steps),
                in_specs=[in_spec, in_spec, in_spec, in_spec],
                out_specs=out_spec,
                scratch_shapes=[pltpu.VMEM((_SUBLANES, D), jnp.float32)],
            ),
            compiler_params=pltpu.CompilerParams(
                dimension_semantics=dim_sem,
                vmem_limit_bytes=vmem_limit,
            ),
            cost_estimate=cost,
        )(zxp, zyp, pxp, pyp)

        partials = out[::_SUBLANES, 0]  # one partial sum per core
        return -jnp.sum(partials) / (2.0 * B)

    if detected_cores > 1:
        try:
            return run(detected_cores, core_parallel=True)
        except Exception:
            # Fall back to the safe single-core configuration if explicit
            # core-parallel lowering is not available on this chip/toolchain.
            return run(1, core_parallel=False)
    return run(1, core_parallel=False)


def simsiam_loss_ref(zx, zy, px, py):
    """Pure-JAX reference mirroring the PyTorch forward."""
    l1 = -jnp.mean(jnp.sum(zx.astype(jnp.float32) * py.astype(jnp.float32), axis=1))
    l2 = -jnp.mean(jnp.sum(zy.astype(jnp.float32) * px.astype(jnp.float32), axis=1))
    return (l1 + l2) / 2.0


if __name__ == "__main__":
    key = jax.random.PRNGKey(0)
    kzx, kzy, kpx, kpy = jax.random.split(key, 4)

    # Small embedding batch; B deliberately not a multiple of 8 to exercise padding.
    B, D = 12, 256
    zx = jax.random.normal(kzx, (B, D), dtype=jnp.float32)
    zy = jax.random.normal(kzy, (B, D), dtype=jnp.float32)
    px = jax.random.normal(kpx, (B, D), dtype=jnp.float32)
    py = jax.random.normal(kpy, (B, D), dtype=jnp.float32)

    out = jax.block_until_ready(simsiam_loss(zx, zy, px, py))
    ref = jax.block_until_ready(simsiam_loss_ref(zx, zy, px, py))

    assert jnp.allclose(out, ref, rtol=1e-5, atol=1e-5), (out, ref)
    print("KERNEL_OK")
</pallas_src>

<mosaic_0001>
module attributes {stable_mosaic.version = 11 : i64} {
  func.func @kernel(%arg0: i32, %arg1: i32, %arg2: memref<16x256xf32, #tpu.memory_space<vmem>>, %arg3: memref<16x256xf32, #tpu.memory_space<vmem>>, %arg4: memref<16x256xf32, #tpu.memory_space<vmem>>, %arg5: memref<16x256xf32, #tpu.memory_space<vmem>>, %arg6: memref<8x128xf32, #tpu.memory_space<vmem>>, %arg7: memref<8x256xf32, #tpu.memory_space<vmem>>) attributes {dimension_semantics = [#tpu.dimension_semantics<arbitrary>, #tpu.dimension_semantics<arbitrary>], iteration_bounds = array<i64: 1, 1>, scalar_prefetch = 0 : i64, scratch_operands = 1 : i64, tpu.core_type = #tpu.core_type<tc>, window_params = [{transform_indices = @transform_0, window_bounds = array<i64: 16, 256>}, {transform_indices = @transform_1, window_bounds = array<i64: 16, 256>}, {transform_indices = @transform_2, window_bounds = array<i64: 16, 256>}, {transform_indices = @transform_3, window_bounds = array<i64: 16, 256>}, {transform_indices = @transform_4, window_bounds = array<i64: 8, 128>}]} {
    %c0_i32 = arith.constant 0 : i32
    %0 = arith.cmpi eq, %arg1, %c0_i32 : i32
    %1 = arith.extui %0 : i1 to i32
    %c0_i32_0 = arith.constant 0 : i32
    %2 = arith.cmpi ne, %1, %c0_i32_0 : i32
    scf.if %2 {
      %cst_14 = arith.constant 0.000000e+00 : f32
      %18 = vector.broadcast %cst_14 : f32 to vector<8x256xf32>
      %c0_15 = arith.constant 0 : index
      %c0_16 = arith.constant 0 : index
      %19 = vector.load %arg7[%c0_15, %c0_16] : memref<8x256xf32, #tpu.memory_space<vmem>>, vector<8x256xf32>
      tpu.vector_store %arg7[%c0_15, %c0_16], %18 {strides = array<i32>} : memref<8x256xf32, #tpu.memory_space<vmem>>, vector<8x256xf32>,
    } else {
    }
    %c0 = arith.constant 0 : index
    %c0_1 = arith.constant 0 : index
    %3 = vector.load %arg2[%c0, %c0_1] : memref<16x256xf32, #tpu.memory_space<vmem>>, vector<16x256xf32>
    %c0_2 = arith.constant 0 : index
    %c0_3 = arith.constant 0 : index
    %4 = vector.load %arg3[%c0_2, %c0_3] : memref<16x256xf32, #tpu.memory_space<vmem>>, vector<16x256xf32>
    %c0_4 = arith.constant 0 : index
    %c0_5 = arith.constant 0 : index
    %5 = vector.load %arg4[%c0_4, %c0_5] : memref<16x256xf32, #tpu.memory_space<vmem>>, vector<16x256xf32>
    %c0_6 = arith.constant 0 : index
    %c0_7 = arith.constant 0 : index
    %6 = vector.load %arg5[%c0_6, %c0_7] : memref<16x256xf32, #tpu.memory_space<vmem>>, vector<16x256xf32>
    %7 = arith.mulf %3, %6 : vector<16x256xf32>
    %8 = arith.mulf %4, %5 : vector<16x256xf32>
    %9 = arith.addf %7, %8 : vector<16x256xf32>
    %c0_8 = arith.constant 0 : index
    %c0_9 = arith.constant 0 : index
    %10 = vector.load %arg7[%c0_8, %c0_9] : memref<8x256xf32, #tpu.memory_space<vmem>>, vector<8x256xf32>
    %11 = vector.shape_cast %9 : vector<16x256xf32> to vector<2x8x256xf32>
    %cst = arith.constant dense<0.000000e+00> : vector<8x256xf32>
    %12 = vector.multi_reduction <add>, %11, %cst [0] : vector<2x8x256xf32> to vector<8x256xf32>
    %13 = arith.addf %10, %12 : vector<8x256xf32>
    %c0_10 = arith.constant 0 : index
    %c0_11 = arith.constant 0 : index
    %14 = vector.load %arg7[%c0_10, %c0_11] : memref<8x256xf32, #tpu.memory_space<vmem>>, vector<8x256xf32>
    tpu.vector_store %arg7[%c0_10, %c0_11], %13 {strides = array<i32>} : memref<8x256xf32, #tpu.memory_space<vmem>>, vector<8x256xf32>,
    %c0_i32_12 = arith.constant 0 : i32
    %15 = arith.cmpi eq, %arg1, %c0_i32_12 : i32
    %16 = arith.extui %15 : i1 to i32
    %c0_i32_13 = arith.constant 0 : i32
    %17 = arith.cmpi ne, %16, %c0_i32_13 : i32
    scf.if %17 {
      %c0_14 = arith.constant 0 : index
      %c0_15 = arith.constant 0 : index
      %18 = vector.load %arg7[%c0_14, %c0_15] : memref<8x256xf32, #tpu.memory_space<vmem>>, vector<8x256xf32>
      %19 = vector.shape_cast %18 : vector<8x256xf32> to vector<1x8x256xf32>
      %cst_16 = arith.constant dense<0.000000e+00> : vector<1xf32>
      %20 = vector.multi_reduction <add>, %19, %cst_16 [1, 2] : vector<1x8x256xf32> to vector<1xf32>
      %21 = vector.shape_cast %20 : vector<1xf32> to vector<1x1x1xf32>
      %22 = vector.extract %21[0, 0, 0] : f32 from vector<1x1x1xf32>
      %23 = vector.broadcast %22 : f32 to vector<8x128xf32>
      %c0_17 = arith.constant 0 : index
      %c0_18 = arith.constant 0 : index
      %24 = vector.load %arg6[%c0_17, %c0_18] : memref<8x128xf32, #tpu.memory_space<vmem>>, vector<8x128xf32>
      tpu.vector_store %arg6[%c0_17, %c0_18], %23 {strides = array<i32>} : memref<8x128xf32, #tpu.memory_space<vmem>>, vector<8x128xf32>,
    } else {
    }
    return
  }
  func.func @transform_0(%arg0: i32, %arg1: i32) -> (i32, i32) {
    %c1_i32 = arith.constant 1 : i32
    %0 = arith.muli %arg0, %c1_i32 : i32
    %1 = arith.addi %0, %arg1 : i32
    %c0_i32 = arith.constant 0 : i32
    %c0_i32_0 = arith.constant 0 : i32
    return %1, %c0_i32 : i32, i32
  }
  func.func @transform_1(%arg0: i32, %arg1: i32) -> (i32, i32) {
    %c1_i32 = arith.constant 1 : i32
    %0 = arith.muli %arg0, %c1_i32 : i32
    %1 = arith.addi %0, %arg1 : i32
    %c0_i32 = arith.constant 0 : i32
    %c0_i32_0 = arith.constant 0 : i32
    return %1, %c0_i32 : i32, i32
  }
  func.func @transform_2(%arg0: i32, %arg1: i32) -> (i32, i32) {
    %c1_i32 = arith.constant 1 : i32
    %0 = arith.muli %arg0, %c1_i32 : i32
    %1 = arith.addi %0, %arg1 : i32
    %c0_i32 = arith.constant 0 : i32
    %c0_i32_0 = arith.constant 0 : i32
    return %1, %c0_i32 : i32, i32
  }
  func.func @transform_3(%arg0: i32, %arg1: i32) -> (i32, i32) {
    %c1_i32 = arith.constant 1 : i32
    %0 = arith.muli %arg0, %c1_i32 : i32
    %1 = arith.addi %0, %arg1 : i32
    %c0_i32 = arith.constant 0 : i32
    %c0_i32_0 = arith.constant 0 : i32
    return %1, %c0_i32 : i32, i32
  }
  func.func @transform_4(%arg0: i32, %arg1: i32) -> (i32, i32) {
    %c0_i32 = arith.constant 0 : i32
    %c0_i32_0 = arith.constant 0 : i32
    return %arg0, %c0_i32 : i32, i32
  }
}

</mosaic_0001>

<llo_original>
// kernel: tpu_custom_call.1
$region0: #{tpu_custom_call.1}
  #allocation0 [shape = 'u32[]', space=smem, size = 0x4, offset = 0x4, fixed_abs, tag = 'smem constant byte address 0x4 - core index']
  #allocation1 [shape = 'u32[72,128]{1,0:T(1,128)}', space=vmem, size = 0x9000, scoped, tag = 'internal scratch']
  #allocation2 [shape = 'f32[8,256]{1,0:T(8,128)}', space=vmem, size = 0x2000, scoped, tag = 'scratch operand']
  %s0 = inlined_call_operand.hbm [shape: f32[16,256], index: 0, kind: input, shape index: {}]
  %s1 = inlined_call_operand.hbm [shape: f32[16,256], index: 1, kind: input, shape index: {}]
  %s2 = inlined_call_operand.hbm [shape: f32[16,256], index: 2, kind: input, shape index: {}]
  %s3 = inlined_call_operand.hbm [shape: f32[16,256], index: 3, kind: input, shape index: {}]
  %s4 = inlined_call_operand.hbm [shape: f32[8,128], index: 4, kind: output, shape index: {}]
  %s5 = sld [smem:[#allocation0]]
  $region50: #{tpu_custom_call.1} parent=0
    _
  %s7 = ssub.s32 1, %s5
  %s8 = scalar_select 0, %s7, %s5
  $region1: #{tpu_custom_call.1} parent=0
    #allocation3 [shape = 'u8[16384]{0}', space=vmem, size = 0x4000, scoped, tag = 'input window, operand 0, single buffered']
    #allocation4 [shape = 's32[1]{0}', space=sflag, size = 0x4, scoped, tag = 'scoped memory for tpu_custom_call.1']
    #allocation5 [shape = 's32[1]{0}', space=sflag, size = 0x4, scoped, tag = 'scoped memory for tpu_custom_call.1']
    #allocation6 [shape = 'u8[16384]{0}', space=vmem, size = 0x4000, scoped, tag = 'input window, operand 1, single buffered']
    #allocation7 [shape = 's32[1]{0}', space=sflag, size = 0x4, scoped, tag = 'scoped memory for tpu_custom_call.1']
    #allocation8 [shape = 'u8[16384]{0}', space=vmem, size = 0x4000, scoped, tag = 'input window, operand 2, single buffered']
    #allocation9 [shape = 'u8[16384]{0}', space=vmem, size = 0x4000, scoped, tag = 'input window, operand 3, single buffered']
    #allocation10 [shape = 's32[1]{0}', space=sflag, size = 0x4, scoped, tag = 'scoped memory for tpu_custom_call.1']
    #allocation11 [shape = 'u8[4096]{0}', space=vmem, size = 0x1000, scoped, tag = 'output window, operand 0, single buffered']
    %9 = vsyncpa [#allocation4], 0
    %10 = vsyncpa [#allocation7], 0
    %11 = vsyncpa [#allocation10], 0
    %12 = vsyncpa [#allocation5], 0
    // Predicated region
    $region2: #{tpu_custom_call.1} parent=1 // pred_check
      _
    $region3: #{tpu_custom_call.1} parent=1 // pred_check_branch
      %14 = sbr.rel (0) target = $region5
    $region4: #{tpu_custom_call.1} parent=1 // pred_region
      %s15 = sadd.s32 0, 0
      %s16 = smul.u32 2, %s15
      %18 = vsyncadd [#allocation4], 0
      %s19 = smul.addr %s16, 2
      %s20 = smul.addr %s19, 8
      %s21 = scalar_lea.hbm %s0, %s20
      %s22 = sshll.u32 %s21, 4
      %s23 = int_to_ptr.hbm [resolvable:$true] %s22
      %s24 = sshll.u32 [#allocation3], 4
      %s25 = int_to_ptr.vmem [resolvable:$true] %s24
      %30 = dma.hbm_to_vmem [thread:$0]  %s23, 512, %s25, [#allocation4], 256, 256, 16
    $region5: #{tpu_custom_call.1} parent=1 // pred_fallthru
      _
    // Predicated region
    $region6: #{tpu_custom_call.1} parent=1 // pred_check
      _
    $region7: #{tpu_custom_call.1} parent=1 // pred_check_branch
      %32 = sbr.rel (0) target = $region9
    $region8: #{tpu_custom_call.1} parent=1 // pred_region
      %s33 = sadd.s32 0, 0
      %s34 = smul.u32 2, %s33
      %36 = vsyncadd [#allocation7], 0
      %s37 = smul.addr %s34, 2
      %s38 = smul.addr %s37, 8
      %s39 = scalar_lea.hbm %s1, %s38
      %s40 = sshll.u32 %s39, 4
      %s41 = int_to_ptr.hbm [resolvable:$true] %s40
      %s42 = sshll.u32 [#allocation6], 4
      %s43 = int_to_ptr.vmem [resolvable:$true] %s42
      %48 = dma.hbm_to_vmem [thread:$0]  %s41, 512, %s43, [#allocation7], 256, 256, 16
    $region9: #{tpu_custom_call.1} parent=1 // pred_fallthru
      _
    // Predicated region
    $region10: #{tpu_custom_call.1} parent=1 // pred_check
      _
    $region11: #{tpu_custom_call.1} parent=1 // pred_check_branch
      %50 = sbr.rel (0) target = $region13
    $region12: #{tpu_custom_call.1} parent=1 // pred_region
      %s51 = sadd.s32 0, 0
      %s52 = smul.u32 2, %s51
      %54 = vsyncadd [#allocation7], 0
      %s55 = smul.addr %s52, 2
      %s56 = smul.addr %s55, 8
      %s57 = scalar_lea.hbm %s2, %s56
      %s58 = sshll.u32 %s57, 4
      %s59 = int_to_ptr.hbm [resolvable:$true] %s58
      %s60 = sshll.u32 [#allocation8], 4
      %s61 = int_to_ptr.vmem [resolvable:$true] %s60
      %66 = dma.hbm_to_vmem [thread:$0]  %s59, 512, %s61, [#allocation7], 256, 256, 16
    $region13: #{tpu_custom_call.1} parent=1 // pred_fallthru
      _
    // Predicated region
    $region14: #{tpu_custom_call.1} parent=1 // pred_check
      _
    $region15: #{tpu_custom_call.1} parent=1 // pred_check_branch
      %68 = sbr.rel (0) target = $region17
    $region16: #{tpu_custom_call.1} parent=1 // pred_region
      %s69 = sadd.s32 0, 0
      %s70 = smul.u32 2, %s69
      %72 = vsyncadd [#allocation10], 0
      %s73 = smul.addr %s70, 2
      %s74 = smul.addr %s73, 8
      %s75 = scalar_lea.hbm %s3, %s74
      %s76 = sshll.u32 %s75, 4
      %s77 = int_to_ptr.hbm [resolvable:$true] %s76
      %s78 = sshll.u32 [#allocation9], 4
      %s79 = int_to_ptr.vmem [resolvable:$true] %s78
      %84 = dma.hbm_to_vmem [thread:$0]  %s77, 512, %s79, [#allocation10], 256, 256, 16
    $region17: #{tpu_custom_call.1} parent=1 // pred_fallthru
      _
    // Predicated region
    $region18: #{tpu_custom_call.1} parent=1 // pred_check
      _
    $region19: #{tpu_custom_call.1} parent=1 // pred_check_branch
      %86 = sbr.rel (0) target = $region21
    $region20: #{tpu_custom_call.1} parent=1 // pred_region
      %88 = dma.done [#allocation4], 512
    $region21: #{tpu_custom_call.1} parent=1 // pred_fallthru
      _
    // Predicated region
    $region22: #{tpu_custom_call.1} parent=1 // pred_check
      _
    $region23: #{tpu_custom_call.1} parent=1 // pred_check_branch
      %90 = sbr.rel (0) target = $region25
    $region24: #{tpu_custom_call.1} parent=1 // pred_region
      %92 = dma.done [#allocation7], 512
    $region25: #{tpu_custom_call.1} parent=1 // pred_fallthru
      _
    // Predicated region
    $region26: #{tpu_custom_call.1} parent=1 // pred_check
      _
    $region27: #{tpu_custom_call.1} parent=1 // pred_check_branch
      %94 = sbr.rel (0) target = $region29
    $region28: #{tpu_custom_call.1} parent=1 // pred_region
      %96 = dma.done [#allocation7], 512
    $region29: #{tpu_custom_call.1} parent=1 // pred_fallthru
      _
    // Predicated region
    $region30: #{tpu_custom_call.1} parent=1 // pred_check
      _
    $region31: #{tpu_custom_call.1} parent=1 // pred_check_branch
      %98 = sbr.rel (0) target = $region33
    $region32: #{tpu_custom_call.1} parent=1 // pred_region
      %100 = dma.done [#allocation10], 512
    $region33: #{tpu_custom_call.1} parent=1 // pred_fallthru
      _
    %s101 = sadd.s32 0, 0
    %s102 = smul.u32 2, %s101
    %s103 = sadd.s32 0, 0
    %s104 = smul.u32 2, %s103
    %s105 = sadd.s32 0, 0
    %s106 = smul.u32 2, %s105
    %s107 = sadd.s32 0, 0
    %s108 = smul.u32 2, %s107
    %p109 = scmp.eq.s32.totalorder 0, 0
    // Predicated region
    $region34: #{tpu_custom_call.1} parent=1 // pred_check
      %p110 = pneg %p109
    $region35: #{tpu_custom_call.1} parent=1 // pred_check_branch
      %112 = sbr.rel (%p110) target = $region37
    $region36: #{tpu_custom_call.1} parent=1 // pred_region
      %113 = vst [vmem:[#allocation2] sm:$0xff] 0.0
      %114 = vst [vmem:[#allocation2 + $0x8] sm:$0xff] 0.0
    $region37: #{tpu_custom_call.1} parent=1 // pred_fallthru
      _
    %v115 = vld [vmem:[#allocation3] sm:$0xff]
    %v116 = vld [vmem:[#allocation3 + $0x8] sm:$0xff]
    %v117 = vld [vmem:[#allocation3 + $0x10] sm:$0xff]
    %v118 = vld [vmem:[#allocation3 + $0x18] sm:$0xff]
    %v119 = vld [vmem:[#allocation6] sm:$0xff]
    %v120 = vld [vmem:[#allocation6 + $0x8] sm:$0xff]
    %v121 = vld [vmem:[#allocation6 + $0x10] sm:$0xff]
    %v122 = vld [vmem:[#allocation6 + $0x18] sm:$0xff]
    %v123 = vld [vmem:[#allocation8] sm:$0xff]
    %v124 = vld [vmem:[#allocation8 + $0x8] sm:$0xff]
    %v125 = vld [vmem:[#allocation8 + $0x10] sm:$0xff]
    %v126 = vld [vmem:[#allocation8 + $0x18] sm:$0xff]
    %v127 = vld [vmem:[#allocation9] sm:$0xff]
    %v128 = vld [vmem:[#allocation9 + $0x8] sm:$0xff]
    %v129 = vld [vmem:[#allocation9 + $0x10] sm:$0xff]
    %v130 = vld [vmem:[#allocation9 + $0x18] sm:$0xff]
    %v131 = vmul.f32 %v115, %v127
    %v132 = vmul.f32 %v116, %v128
    %v133 = vmul.f32 %v117, %v129
    %v134 = vmul.f32 %v118, %v130
    %v135 = vmul.f32 %v119, %v123
    %v136 = vmul.f32 %v120, %v124
    %v137 = vmul.f32 %v121, %v125
    %v138 = vmul.f32 %v122, %v126
    %v139 = vadd.f32 %v131, %v135
    %v140 = vadd.f32 %v132, %v136
    %v141 = vadd.f32 %v133, %v137
    %v142 = vadd.f32 %v134, %v138
    %v143 = vld [vmem:[#allocation2] sm:$0xff]
    %v144 = vld [vmem:[#allocation2 + $0x8] sm:$0xff]
    %v145 = vadd.f32 %v139, %v141
    %v146 = vadd.f32 %v140, %v142
    %v147 = vadd.f32 %v143, %v145
    %v148 = vadd.f32 %v144, %v146
    %149 = vst [vmem:[#allocation2] sm:$0xff] %v147
    %150 = vst [vmem:[#allocation2 + $0x8] sm:$0xff] %v148
    // Predicated region
    $region38: #{tpu_custom_call.1} parent=1 // pred_check
      %p151 = pneg %p109
    $region39: #{tpu_custom_call.1} parent=1 // pred_check_branch
      %153 = sbr.rel (%p151) target = $region41
    $region40: #{tpu_custom_call.1} parent=1 // pred_region
      %v154 = vld [vmem:[#allocation2] sm:$0xff]
      %v155 = vld [vmem:[#allocation2 + $0x8] sm:$0xff]
      %v156 = vadd.f32 %v154, %v155
      %157 = vadd.xlane.f32.xlu0 %v156
      %v158 = vpop.xlane.xlu0 %157
      %v159 = vrot.slane %v158, 4
      %v160 = vadd.f32 %v158, %v159
      %v161 = vrot.slane %v160, 2
      %v162 = vadd.f32 %v160, %v161
      %v163 = vrot.slane %v162, 1
      %v164 = vadd.f32 %v162, %v163
      %s165 = vtos %v164
      %v166 = vstv %s165
      %167 = vst [vmem:[#allocation11] sm:$0xff] %v166
    $region41: #{tpu_custom_call.1} parent=1 // pred_fallthru
      _
    // Predicated region
    $region42: #{tpu_custom_call.1} parent=1 // pred_check
      _
    $region43: #{tpu_custom_call.1} parent=1 // pred_check_branch
      %169 = sbr.rel (0) target = $region45
    $region44: #{tpu_custom_call.1} parent=1 // pred_region
      %171 = vsyncadd [#allocation5], 0
      %s173 = sshll.u32 [#allocation11], 4
      %s174 = int_to_ptr.vmem [resolvable:$true] %s173
      %s175 = sshll.u32 %s4, 4
      %s176 = int_to_ptr.hbm [resolvable:$true] %s175
      %178 = dma.vmem_to_hbm [thread:$0]  %s174, 128, %s176, [#allocation5]
    $region45: #{tpu_custom_call.1} parent=1 // pred_fallthru
      _
    // Predicated region
    $region46: #{tpu_custom_call.1} parent=1 // pred_check
      _
    $region47: #{tpu_custom_call.1} parent=1 // pred_check_branch
      %180 = sbr.rel (0) target = $region49
    $region48: #{tpu_custom_call.1} parent=1 // pred_region
      %182 = dma.done [#allocation5], 128
    $region49: #{tpu_custom_call.1} parent=1 // pred_fallthru
      _
    %183 = vsyncpa [#allocation4], 1
    %184 = vsyncpa [#allocation7], 1
    %185 = vsyncpa [#allocation10], 1
    %186 = vsyncpa [#allocation5], 1

</llo_original>
